<compile_context>
chip_gen: v5e
topology: v5e:2x2
jax: 0.10.0
libtpu: 0.0.40
codegen_flags: <defaults>
</compile_context>

<pallas_src>
import jax
import jax.numpy as jnp
from jax.experimental import pallas as pl
from jax.experimental.pallas import tpu as pltpu


def _conv1x1_sigmoid_kernel(x_ref, w_ref, b_ref, o_ref):
    # x_ref: (1, Cin, TM)   activations: channels on sublanes, spatial on lanes
    # w_ref: (Cout, Cin)    conv weight (1x1x1 kernel dims squeezed)
    # b_ref: (Cout, 1)      bias
    # o_ref: (1, Cout, TM)  output: lane-dense along spatial
    acc = jnp.dot(w_ref[...], x_ref[0], preferred_element_type=jnp.float32)
    acc = acc + b_ref[...]                       # (Cout, TM) + (Cout, 1)
    o_ref[0] = jax.nn.sigmoid(acc).astype(o_ref.dtype)


def _pick_spatial_tile(S, Cin, Cout, *, cap=32768, vmem_budget_bytes=8 << 20):
    """Largest spatial tile (multiple of 128, <= cap) whose double-buffered
    in+out blocks fit comfortably inside the default scoped VMEM."""
    if S <= cap:
        # Block == full dim is always legal (even if not a multiple of 128).
        return S
    # bytes per spatial element: (Cin read + Cout write) * 4B * 2 (double buf)
    per_elem = (Cin + Cout) * 4 * 2
    tm = min(cap, max(128, vmem_budget_bytes // per_elem))
    return (tm // 128) * 128


def conv1x1x1_sigmoid(x_ncdhw, weight, bias, *, tile_spatial_cap=32768):
    """Conv3d(kernel_size=(1,1,1)) + Sigmoid via a Pallas kernel.

    x_ncdhw: (N, C_in, D, H, W) float32
    weight:  (C_out, C_in)      (PyTorch Conv3d weight squeezed over 1x1x1)
    bias:    (C_out,)
    returns: (N, C_out, D, H, W) float32
    """
    N, Cin, D, H, W = x_ncdhw.shape
    Cout = weight.shape[0]
    S = D * H * W

    # Free reshape: channels already precede spatial in NCDHW.
    x3 = x_ncdhw.reshape(N, Cin, S)

    tm = _pick_spatial_tile(S, Cin, Cout, cap=tile_spatial_cap)
    n_s = pl.cdiv(S, tm)
    grid = (N, n_s)

    w = weight.astype(jnp.float32)                   # (Cout, Cin), no transpose
    b2 = bias.astype(jnp.float32).reshape(Cout, 1)   # (Cout, 1)

    # Advisory cost hint for XLA's scheduler around the custom call.
    cost = pl.CostEstimate(
        flops=2 * N * S * Cin * Cout + 2 * N * S * Cout,
        transcendentals=N * S * Cout,
        bytes_accessed=4 * (N * S * Cin + N * S * Cout + Cout * Cin + Cout),
    )

    out = pl.pallas_call(
        _conv1x1_sigmoid_kernel,
        out_shape=jax.ShapeDtypeStruct((N, Cout, S), x_ncdhw.dtype),
        grid_spec=pltpu.PrefetchScalarGridSpec(
            num_scalar_prefetch=0,
            grid=grid,
            in_specs=[
                pl.BlockSpec((1, Cin, tm), lambda n, s: (n, 0, s)),
                # Constant-index blocks: kept resident across grid steps.
                pl.BlockSpec((Cout, Cin), lambda n, s: (0, 0)),
                pl.BlockSpec((Cout, 1), lambda n, s: (0, 0)),
            ],
            out_specs=pl.BlockSpec((1, Cout, tm), lambda n, s: (n, 0, s)),
        ),
        compiler_params=pltpu.CompilerParams(
            dimension_semantics=("parallel", "parallel"),
        ),
        cost_estimate=cost,
    )(x3, w, b2)

    return out.reshape(N, Cout, D, H, W)


def convolve_forward(x, weight, bias):
    """Full Convolve.forward: y = model(x); sigmoid(conv1x1x1(y))."""
    # TODO(synk): the wrapped `self.model` (a UNet in the fib25 tutorial) is an
    # external constructor argument; modeled here as identity.
    y = x
    return conv1x1x1_sigmoid(y, weight, bias)


def _reference(x, weight, bias):
    # Pure-JAX reference for the 1x1x1 conv + sigmoid.
    y = jnp.einsum("ncdhw,oc->nodhw", x, weight) + bias[None, :, None, None, None]
    return jax.nn.sigmoid(y)


if __name__ == "__main__":
    key = jax.random.PRNGKey(0)
    k_x, k_w, k_b = jax.random.split(key, 3)

    # fib25 tutorial: Convolve(unet, in_channels=12, out_channels=3)
    N, Cin, Cout = 2, 12, 3
    D = H = W = 8

    x = jax.random.normal(k_x, (N, Cin, D, H, W), dtype=jnp.float32)

    # Deterministic init matching PyTorch Conv3d default bounds:
    # fan_in = Cin * 1*1*1, bound = 1/sqrt(fan_in) for weight and bias.
    fan_in = Cin * 1 * 1 * 1
    bound = 1.0 / jnp.sqrt(jnp.float32(fan_in))
    weight = jax.random.uniform(k_w, (Cout, Cin), jnp.float32, -bound, bound)
    bias = jax.random.uniform(k_b, (Cout,), jnp.float32, -bound, bound)

    out = jax.jit(convolve_forward)(x, weight, bias)
    out = jax.block_until_ready(out)

    ref = _reference(x, weight, bias)
    assert out.shape == (N, Cout, D, H, W), out.shape
    assert jnp.allclose(out, ref, atol=1e-5, rtol=1e-5), float(
        jnp.max(jnp.abs(out - ref))
    )

    print("KERNEL_OK")
</pallas_src>

<mosaic_0001>
module attributes {stable_mosaic.version = 11 : i64} {
  func.func @_conv1x1_sigmoid_kernel(%arg0: i32, %arg1: i32, %arg2: memref<1x12x512xf32, #tpu.memory_space<vmem>>, %arg3: memref<3x12xf32, #tpu.memory_space<vmem>>, %arg4: memref<3x1xf32, #tpu.memory_space<vmem>>, %arg5: memref<1x3x512xf32, #tpu.memory_space<vmem>>) attributes {dimension_semantics = [#tpu.dimension_semantics<parallel>, #tpu.dimension_semantics<parallel>], iteration_bounds = array<i64: 2, 1>, scalar_prefetch = 0 : i64, scratch_operands = 0 : i64, tpu.core_type = #tpu.core_type<tc>, window_params = [{transform_indices = @transform_0, window_bounds = array<i64: 1, 12, 512>}, {pipeline_mode = #tpu.pipeline_mode<synchronous>, transform_indices = @transform_1, window_bounds = array<i64: 3, 12>}, {pipeline_mode = #tpu.pipeline_mode<synchronous>, transform_indices = @transform_2, window_bounds = array<i64: 3, 1>}, {transform_indices = @transform_3, window_bounds = array<i64: 1, 3, 512>}]} {
    %c0 = arith.constant 0 : index
    %c0_0 = arith.constant 0 : index
    %0 = vector.load %arg3[%c0, %c0_0] : memref<3x12xf32, #tpu.memory_space<vmem>>, vector<3x12xf32>
    %c0_1 = arith.constant 0 : index
    %c0_2 = arith.constant 0 : index
    %c0_3 = arith.constant 0 : index
    %1 = vector.load %arg2[%c0_1, %c0_2, %c0_3] : memref<1x12x512xf32, #tpu.memory_space<vmem>>, vector<1x12x512xf32>
    %2 = vector.shape_cast %1 : vector<1x12x512xf32> to vector<12x512xf32>
    %cst = arith.constant dense<0.000000e+00> : vector<3x512xf32>
    %3 = tpu.matmul %0, %2, %cst {dimension_numbers = #tpu.dot_dimension_numbers<[1], [0], [0], [1], [0, 0, 1, 1], [], []>} : vector<3x12xf32>, vector<12x512xf32>, vector<3x512xf32> -> vector<3x512xf32>
    %c0_4 = arith.constant 0 : index
    %c0_5 = arith.constant 0 : index
    %4 = vector.load %arg4[%c0_4, %c0_5] : memref<3x1xf32, #tpu.memory_space<vmem>>, vector<3x1xf32>
    %5 = vector.broadcast %4 : vector<3x1xf32> to vector<3x512xf32>
    %6 = arith.addf %3, %5 : vector<3x512xf32>
    %7 = arith.negf %6 : vector<3x512xf32>
    %8 = math.exp %7 : vector<3x512xf32>
    %cst_6 = arith.constant 1.000000e+00 : f32
    %9 = vector.broadcast %cst_6 : f32 to vector<3x512xf32>
    %10 = arith.addf %9, %8 : vector<3x512xf32>
    %11 = arith.divf %9, %10 : vector<3x512xf32>
    %c0_7 = arith.constant 0 : index
    %c0_8 = arith.constant 0 : index
    %c0_9 = arith.constant 0 : index
    %12 = vector.load %arg5[%c0_7, %c0_8, %c0_9] : memref<1x3x512xf32, #tpu.memory_space<vmem>>, vector<1x3x512xf32>
    %13 = vector.shape_cast %12 : vector<1x3x512xf32> to vector<3x512xf32>
    %14 = vector.shape_cast %11 : vector<3x512xf32> to vector<1x3x512xf32>
    tpu.vector_store %arg5[%c0_7, %c0_8, %c0_9], %14 {strides = array<i32>} : memref<1x3x512xf32, #tpu.memory_space<vmem>>, vector<1x3x512xf32>,
    return
  }
  func.func @transform_0(%arg0: i32, %arg1: i32) -> (i32, i32, i32) {
    %c0_i32 = arith.constant 0 : i32
    %c0_i32_0 = arith.constant 0 : i32
    return %arg0, %c0_i32, %arg1 : i32, i32, i32
  }
  func.func @transform_1(%arg0: i32, %arg1: i32) -> (i32, i32) {
    %c0_i32 = arith.constant 0 : i32
    %c0_i32_0 = arith.constant 0 : i32
    %c0_i32_1 = arith.constant 0 : i32
    return %c0_i32, %c0_i32_0 : i32, i32
  }
  func.func @transform_2(%arg0: i32, %arg1: i32) -> (i32, i32) {
    %c0_i32 = arith.constant 0 : i32
    %c0_i32_0 = arith.constant 0 : i32
    %c0_i32_1 = arith.constant 0 : i32
    return %c0_i32, %c0_i32_0 : i32, i32
  }
  func.func @transform_3(%arg0: i32, %arg1: i32) -> (i32, i32, i32) {
    %c0_i32 = arith.constant 0 : i32
    %c0_i32_0 = arith.constant 0 : i32
    return %arg0, %c0_i32, %arg1 : i32, i32, i32
  }
}

</mosaic_0001>

<llo_original>
// kernel: convolve_forward.1
$region0: #{convolve_forward.1}
  #allocation0 [shape = 'u32[]', space=smem, size = 0x4, offset = 0x4, fixed_abs, tag = 'smem constant byte address 0x4 - core index']
  #allocation1 [shape = 'u32[72,128]{1,0:T(1,128)}', space=vmem, size = 0x9000, scoped, tag = 'internal scratch']
  %s0 = inlined_call_operand.vmem [shape: f32[2,12,512], index: 0, kind: input, shape index: {}]
  %s1 = inlined_call_operand.vmem [shape: f32[3,12], index: 1, kind: input, shape index: {}]
  %s2 = inlined_call_operand.vmem [shape: f32[3,1], index: 2, kind: input, shape index: {}]
  %s3 = inlined_call_operand.vmem [shape: f32[2,3,512], index: 3, kind: output, shape index: {}]
  %s4 = sld [smem:[#allocation0]]
  $region45: #{convolve_forward.1} parent=0
    _
  %s6 = ssub.s32 1, %s4
  %s7 = scalar_select 0, %s6, %s4
  loop: start=0, step=1, limit=4
  $region2: #{convolve_forward.1} parent=0 // loop_pre_header
    _
  $region3: #{convolve_forward.1} parent=0 // loop_header
    %s9 = sphi 0, %s13
    %p10 = scmp.ge.s32.totalorder %s9, 4
    %s16 = sphi 0, %s28
    %s17 = sphi 0, %s24
    %s18 = sphi 0, %s16
    %s19 = sphi 0, %s17
    %s20 = sphi 0, %s18
    %s21 = sphi 0, %s19
    %s33 = sphi 0, %s35
    %s36 = sphi 0, %s33
    %s37 = sphi 0, %s36
    %s53 = sphi 0, %s37
    %s57 = sphi 0, %s57
    %s59 = sphi 0, %s57
    %s60 = sphi 0, %s59
    %s74 = sphi 0, %s60
    %s78 = sphi 0, %s78
    %s80 = sphi 0, %s78
    %s81 = sphi 0, %s80
    %s95 = sphi 0, %s81
    %s103 = sphi 0, %s105
    %s106 = sphi 0, %s103
    %s107 = sphi 0, %s106
    %s123 = sphi 0, %s107
  $region4: #{convolve_forward.1} parent=0 // loop_header_branch
    %12 = sbr.rel (%p10) target = $region8
  $region5: #{convolve_forward.1} parent=0 // loop_body
    %s14 = ssub.s32 %s9, 1
    %s15 = ssub.s32 %s9, 2
    %s22 = sadd.s32 1, %s17
    %p23 = scmp.ge.s32.totalorder %s22, 1
    %s24 = scalar_select %p23, 0, %s22
    %s25 = sadd.s32 1, %s16
    %s26 = scalar_select %p23, %s25, %s16
    %p27 = scmp.ge.s32.totalorder %s26, 2
    %s28 = scalar_select %p27, 0, %s26
    %s29 = ssub.s32 %s16, %s28
    %s30 = ssub.s32 %s17, %s24
    %s31 = sor.u32 %s29, %s30
    %p32 = scmp.eq.s32.totalorder %s31, 0
    %s34 = sadd.s32 %s33, 1
    %s35 = scalar_select %p32, %s33, %s34
    %p38 = pneg %p32
    %p39 = scmp.eq.s32.totalorder %s9, 1
    %p40 = por %p38, %p39
    %p41 = scmp.ne.s32.totalorder %s33, %s36
    %p42 = scmp.eq.s32.totalorder %s9, 0
    %p43 = por %p41, %p42
    %p44 = scmp.ne.s32.totalorder %s33, %s36
    %p45 = scmp.eq.s32.totalorder %s14, 1
    %p46 = por %p44, %p45
    %p47 = scmp.ne.s32.totalorder %s36, %s37
    %p48 = scmp.eq.s32.totalorder %s14, 0
    %p49 = por %p47, %p48
    %p50 = scmp.ne.s32.totalorder %s36, %s37
    %p51 = scmp.eq.s32.totalorder %s15, 1
    %p52 = por %p50, %p51
    %p54 = scmp.ne.s32.totalorder %s37, %s53
    %p55 = scmp.eq.s32.totalorder %s15, 0
    %p56 = por %p54, %p55
    %s58 = sadd.s32 %s57, 1
    %p61 = scmp.eq.s32.totalorder %s9, 1
    %p62 = scmp.ne.s32.totalorder %s57, %s59
    %p63 = scmp.eq.s32.totalorder %s9, 0
    %p64 = por %p62, %p63
    %p65 = scmp.ne.s32.totalorder %s57, %s59
    %p66 = scmp.eq.s32.totalorder %s14, 1
    %p67 = por %p65, %p66
    %p68 = scmp.ne.s32.totalorder %s59, %s60
    %p69 = scmp.eq.s32.totalorder %s14, 0
    %p70 = por %p68, %p69
    %p71 = scmp.ne.s32.totalorder %s59, %s60
    %p72 = scmp.eq.s32.totalorder %s15, 1
    %p73 = por %p71, %p72
    %p75 = scmp.ne.s32.totalorder %s60, %s74
    %p76 = scmp.eq.s32.totalorder %s15, 0
    %p77 = por %p75, %p76
    %s79 = sadd.s32 %s78, 1
    %p82 = scmp.eq.s32.totalorder %s9, 1
    %p83 = scmp.ne.s32.totalorder %s78, %s80
    %p84 = scmp.eq.s32.totalorder %s9, 0
    %p85 = por %p83, %p84
    %p86 = scmp.ne.s32.totalorder %s78, %s80
    %p87 = scmp.eq.s32.totalorder %s14, 1
    %p88 = por %p86, %p87
    %p89 = scmp.ne.s32.totalorder %s80, %s81
    %p90 = scmp.eq.s32.totalorder %s14, 0
    %p91 = por %p89, %p90
    %p92 = scmp.ne.s32.totalorder %s80, %s81
    %p93 = scmp.eq.s32.totalorder %s15, 1
    %p94 = por %p92, %p93
    %p96 = scmp.ne.s32.totalorder %s81, %s95
    %p97 = scmp.eq.s32.totalorder %s15, 0
    %p98 = por %p96, %p97
    %s99 = ssub.s32 %s16, %s28
    %s100 = ssub.s32 %s17, %s24
    %s101 = sor.u32 %s99, %s100
    %p102 = scmp.eq.s32.totalorder %s101, 0
    %s104 = sadd.s32 %s103, 1
    %s105 = scalar_select %p102, %s103, %s104
    %p108 = pneg %p102
    %p109 = scmp.eq.s32.totalorder %s9, 1
    %p110 = por %p108, %p109
    %p111 = scmp.ne.s32.totalorder %s103, %s106
    %p112 = scmp.eq.s32.totalorder %s9, 0
    %p113 = por %p111, %p112
    %p114 = scmp.ne.s32.totalorder %s103, %s106
    %p115 = scmp.eq.s32.totalorder %s14, 1
    %p116 = por %p114, %p115
    %p117 = scmp.ne.s32.totalorder %s106, %s107
    %p118 = scmp.eq.s32.totalorder %s14, 0
    %p119 = por %p117, %p118
    %p120 = scmp.ne.s32.totalorder %s106, %s107
    %p121 = scmp.eq.s32.totalorder %s15, 1
    %p122 = por %p120, %p121
    %p124 = scmp.ne.s32.totalorder %s107, %s123
    %p125 = scmp.eq.s32.totalorder %s15, 0
    %p126 = por %p124, %p125
    %p127 = scmp.le.s32.totalorder 1, %s9
    %p128 = scmp.lt.s32.totalorder %s9, 3
    %p129 = pnand %p127, %p128
    %p130 = pneg %p129
    // Predicated region
    $region9: #{convolve_forward.1} parent=5 // pred_check
      _
    $region10: #{convolve_forward.1} parent=5 // pred_check_branch
      %132 = sbr.rel (%p129) target = $region12
    $region11: #{convolve_forward.1} parent=5 // pred_region
      %s133 = ssub.s32 %s9, 1
      // Predicated region
      $region13: #{convolve_forward.1} parent=11 // pred_check
        %p134 = pneg %p70
      $region14: #{convolve_forward.1} parent=11 // pred_check_branch
        %136 = sbr.rel (%p134) target = $region16
      $region15: #{convolve_forward.1} parent=11 // pred_region
        _
      $region16: #{convolve_forward.1} parent=11 // pred_fallthru
        _
      // Predicated region
      $region17: #{convolve_forward.1} parent=11 // pred_check
        %p137 = pneg %p91
      $region18: #{convolve_forward.1} parent=11 // pred_check_branch
        %139 = sbr.rel (%p137) target = $region20
      $region19: #{convolve_forward.1} parent=11 // pred_region
        _
      $region20: #{convolve_forward.1} parent=11 // pred_fallthru
        _
    $region12: #{convolve_forward.1} parent=5 // pred_fallthru
      _
    %p140 = scmp.lt.s32.totalorder %s9, 2
    // Predicated region
    $region21: #{convolve_forward.1} parent=5 // pred_check
      %p141 = pneg %p140
    $region22: #{convolve_forward.1} parent=5 // pred_check_branch
      %143 = sbr.rel (%p141) target = $region24
    $region23: #{convolve_forward.1} parent=5 // pred_region
      // Predicated region
      $region25: #{convolve_forward.1} parent=23 // pred_check
        %p144 = pneg %p43
      $region26: #{convolve_forward.1} parent=23 // pred_check_branch
        %146 = sbr.rel (%p144) target = $region28
      $region27: #{convolve_forward.1} parent=23 // pred_region
        %s147 = smul.u32 4, %s17
        %p148 = scmp.lt.s32.totalorder %s16, 1
        %s149 = scalar_select %p148, %s16, 1
        %p150 = scmp.lt.s32.totalorder %s147, 3
        %s151 = scalar_select %p150, %s147, 3
        %s152 = smul.addr %s149, 8
        %s153 = sadd.s32 %s151, %s152
        %s154 = smul.addr %s153, 8
        %s155 = scalar_lea.vmem %s0, %s154
        %s156 = smul.u32 4, %s17
      $region28: #{convolve_forward.1} parent=23 // pred_fallthru
        _
    $region24: #{convolve_forward.1} parent=5 // pred_fallthru
      _
    %p157 = scmp.le.s32.totalorder 1, %s9
    %p158 = scmp.lt.s32.totalorder %s9, 3
    %p159 = pnand %p157, %p158
    %p160 = pneg %p159
    // Predicated region
    $region29: #{convolve_forward.1} parent=5 // pred_check
      _
    $region30: #{convolve_forward.1} parent=5 // pred_check_branch
      %162 = sbr.rel (%p159) target = $region32
    $region31: #{convolve_forward.1} parent=5 // pred_region
      %s163 = ssub.s32 %s9, 1
      %s164 = smul.u32 4, %s19
      %p165 = scmp.lt.s32.totalorder %s18, 1
      %s166 = scalar_select %p165, %s18, 1
      %p167 = scmp.lt.s32.totalorder %s164, 3
      %s168 = scalar_select %p167, %s164, 3
      %s169 = smul.addr %s166, 8
      %s170 = sadd.s32 %s168, %s169
      %s171 = smul.addr %s170, 8
      %s172 = scalar_lea.vmem %s0, %s171
      %p173 = pneg %p49
      %p174 = pneg %p46
      %p175 = pneg %p70
      %p176 = pneg %p67
      %p177 = pneg %p91
      %p178 = pneg %p88
      %p179 = pneg %p119
      %p180 = pneg %p116
      %s181 = smul.u32 4, %s19
      %p182 = scmp.lt.s32.totalorder %s18, 1
      %s183 = scalar_select %p182, %s18, 1
      %p184 = scmp.lt.s32.totalorder %s181, 3
      %s185 = scalar_select %p184, %s181, 3
      %s186 = smul.addr %s183, 4
      %s187 = sadd.s32 %s185, %s186
      %s188 = smul.addr %s187, 4
      %s189 = scalar_lea.vmem %s3, %s188
      %s190 = smul.u32 4, %s19
      %p191 = scmp.lt.s32.totalorder %s18, 1
      %s192 = scalar_select %p191, %s18, 1
      %p193 = scmp.lt.s32.totalorder %s190, 3
      %s194 = scalar_select %p193, %s190, 3
      %s195 = smul.addr %s192, 8
      %s196 = sadd.s32 %s194, %s195
      %s197 = smul.addr %s196, 8
      %s198 = scalar_lea.vmem %s0, %s197
      %s199 = smul.u32 4, %s19
      %s200 = smul.u32 4, %s19
      %p201 = scmp.lt.s32.totalorder %s18, 1
      %s202 = scalar_select %p201, %s18, 1
      %p203 = scmp.lt.s32.totalorder %s200, 3
      %s204 = scalar_select %p203, %s200, 3
      %s205 = smul.addr %s202, 4
      %s206 = sadd.s32 %s204, %s205
      %s207 = smul.addr %s206, 4
      %s208 = scalar_lea.vmem %s3, %s207
      %s209 = smul.u32 4, %s19
      %v210 = vld [vmem:[%s1] sm:$0x7]
      %v211 = vld [vmem:[%s198] sm:$0xff]
      %v212 = vld [vmem:[%s198 + $0x8] sm:$0xff]
      %v213 = vld [vmem:[%s198 + $0x10] sm:$0xff]
      %v214 = vld [vmem:[%s198 + $0x18] sm:$0xff]
      %v215 = vld [vmem:[%s198 + $0x20] sm:$0xf]
      %v216 = vld [vmem:[%s198 + $0x28] sm:$0xf]
      %v217 = vld [vmem:[%s198 + $0x30] sm:$0xf]
      %v218 = vld [vmem:[%s198 + $0x38] sm:$0xf]
      %v219 = vld [vmem:[%s2] sm:$0x7]
      %221 = vset.pattern.permute.xlu0 0
      %222 = vperm.xlu0 %221, %v219
      %v223 = vpop.permute.xlu0 %222
      %vm225 = vcmask 97280
      %v227 = vsel %vm225, %v210, 0
      %vm229 = vcmask 1043456
      %v231 = vsel %vm229, %v215, 0
      %v234 = vsel %vm229, %v216, 0
      %v237 = vsel %vm229, %v217, 0
      %v240 = vsel %vm229, %v218, 0
      %242 = vmatpush.msra.mxu0 0.0
      %243 = vmatpush.msra.mxu0 0.0
      %244 = vmatpush.msra.mxu0 0.0
      %245 = vmatpush.msra.mxu0 0.0
      %246 = vmatpush.msra.mxu0 0.0
      %247 = vmatpush.msra.mxu0 0.0
      %248 = vmatpush.msra.mxu0 0.0
      %249 = vmatpush.msra.mxu0 0.0
      %250 = vmatpush.msra.mxu0 0.0
      %251 = vmatpush.msra.mxu0 0.0
      %252 = vmatpush.msra.mxu0 0.0
      %253 = vmatpush.msra.mxu0 0.0
      %254 = vmatpush.msra.mxu0 0.0
      %255 = vmatpush.msra.mxu0 0.0
      %256 = vmatpush.msra.mxu0 %v231
      %257 = vmatpush.msra.mxu0 %v211
      %258 = vmatmul.f32.gmra.mxu0 %v227
      %v259 = vpop.f32.mrf.mxu0
      %v260 = vadd.f32 %v223, %v259
      %261 = vdwg.mxu0
      %262 = vmatpush.msra.mxu0 0.0
      %263 = vmatpush.msra.mxu0 0.0
      %264 = vmatpush.msra.mxu0 0.0
      %265 = vmatpush.msra.mxu0 0.0
      %266 = vmatpush.msra.mxu0 0.0
      %267 = vmatpush.msra.mxu0 0.0
      %268 = vmatpush.msra.mxu0 0.0
      %269 = vmatpush.msra.mxu0 0.0
      %270 = vmatpush.msra.mxu0 0.0
      %271 = vmatpush.msra.mxu0 0.0
      %272 = vmatpush.msra.mxu0 0.0
      %273 = vmatpush.msra.mxu0 0.0
      %274 = vmatpush.msra.mxu0 0.0
      %275 = vmatpush.msra.mxu0 0.0
      %276 = vmatpush.msra.mxu0 %v234
      %277 = vmatpush.msra.mxu0 %v212
      %278 = vmatmul.f32.gmra.mxu0 %v227
      %v279 = vpop.f32.mrf.mxu0
      %v280 = vadd.f32 %v223, %v279
      %281 = vdwg.mxu0
      %282 = vmatpush.msra.mxu0 0.0
      %283 = vmatpush.msra.mxu0 0.0
      %284 = vmatpush.msra.mxu0 0.0
      %285 = vmatpush.msra.mxu0 0.0
      %286 = vmatpush.msra.mxu0 0.0
      %287 = vmatpush.msra.mxu0 0.0
      %288 = vmatpush.msra.mxu0 0.0
      %289 = vmatpush.msra.mxu0 0.0
      %290 = vmatpush.msra.mxu0 0.0
      %291 = vmatpush.msra.mxu0 0.0
      %292 = vmatpush.msra.mxu0 0.0
      %293 = vmatpush.msra.mxu0 0.0
      %294 = vmatpush.msra.mxu0 0.0
      %295 = vmatpush.msra.mxu0 0.0
      %296 = vmatpush.msra.mxu0 %v237
      %297 = vmatpush.msra.mxu0 %v213
      %298 = vmatmul.f32.gmra.mxu0 %v227
      %v299 = vpop.f32.mrf.mxu0
      %v300 = vadd.f32 %v223, %v299
      %301 = vdwg.mxu0
      %302 = vmatpush.msra.mxu0 0.0
      %303 = vmatpush.msra.mxu0 0.0
      %304 = vmatpush.msra.mxu0 0.0
      %305 = vmatpush.msra.mxu0 0.0
      %306 = vmatpush.msra.mxu0 0.0
      %307 = vmatpush.msra.mxu0 0.0
      %308 = vmatpush.msra.mxu0 0.0
      %309 = vmatpush.msra.mxu0 0.0
      %310 = vmatpush.msra.mxu0 0.0
      %311 = vmatpush.msra.mxu0 0.0
      %312 = vmatpush.msra.mxu0 0.0
      %313 = vmatpush.msra.mxu0 0.0
      %314 = vmatpush.msra.mxu0 0.0
      %315 = vmatpush.msra.mxu0 0.0
      %316 = vmatpush.msra.mxu0 %v240
      %317 = vmatpush.msra.mxu0 %v214
      %318 = vmatmul.f32.gmra.mxu0 %v227
      %v319 = vpop.f32.mrf.mxu0
      %v320 = vadd.f32 %v223, %v319
      %321 = vdwg.mxu0
      %v322 = vxor.u32 %v260, 2147483648
      %v323 = vxor.u32 %v280, 2147483648
      %v324 = vxor.u32 %v300, 2147483648
      %v325 = vxor.u32 %v320, 2147483648
      %v326 = vmul.f32 %v322, 1.442695
      %v327 = vpow.pop %v326
      %v328 = vmul.f32 %v323, 1.442695
      %v329 = vpow.pop %v328
      %v330 = vmul.f32 %v324, 1.442695
      %v331 = vpow.pop %v330
      %v332 = vmul.f32 %v325, 1.442695
      %v333 = vpow.pop %v332
      %v334 = vadd.f32 %v327, 1.0
      %v335 = vadd.f32 %v329, 1.0
      %v336 = vadd.f32 %v331, 1.0
      %v337 = vadd.f32 %v333, 1.0
      %v338 = vrcp.pop %v334
      %v339 = vmul.f32 %v334, %v338
      %v340 = vsub.f32 1.0, %v339
      %v341 = vmul.f32 %v338, %v340
      %v342 = vadd.f32 %v338, %v341
      %vm343 = vweird.f32 %v334
      %vm344 = vweird.f32 %v338
      %vm345 = vmor %vm343, %vm344
      %v346 = vsel %vm345, %v338, %v342
      %v347 = vand.u32 2147483647, %v334
      %vm348 = vcmp.eq.f32.partialorder %v347, 8.507059e+37
      %v349 = vand.u32 %v334, 2147483648
      %v350 = vor.u32 1.1754944e-38, %v349
      %v351 = vsel %vm348, %v350, %v346
      %v352 = vmul.f32 1.0, %v351
      %v353 = vrcp.pop %v335
      %v354 = vmul.f32 %v335, %v353
      %v355 = vsub.f32 1.0, %v354
      %v356 = vmul.f32 %v353, %v355
      %v357 = vadd.f32 %v353, %v356
      %vm358 = vweird.f32 %v335
      %vm359 = vweird.f32 %v353
      %vm360 = vmor %vm358, %vm359
      %v361 = vsel %vm360, %v353, %v357
      %v362 = vand.u32 2147483647, %v335
      %vm363 = vcmp.eq.f32.partialorder %v362, 8.507059e+37
      %v364 = vand.u32 %v335, 2147483648
      %v365 = vor.u32 1.1754944e-38, %v364
      %v366 = vsel %vm363, %v365, %v361
      %v367 = vmul.f32 1.0, %v366
      %v368 = vrcp.pop %v336
      %v369 = vmul.f32 %v336, %v368
      %v370 = vsub.f32 1.0, %v369
      %v371 = vmul.f32 %v368, %v370
      %v372 = vadd.f32 %v368, %v371
      %vm373 = vweird.f32 %v336
      %vm374 = vweird.f32 %v368
      %vm375 = vmor %vm373, %vm374
      %v376 = vsel %vm375, %v368, %v372
      %v377 = vand.u32 2147483647, %v336
      %vm378 = vcmp.eq.f32.partialorder %v377, 8.507059e+37
      %v379 = vand.u32 %v336, 2147483648
      %v380 = vor.u32 1.1754944e-38, %v379
      %v381 = vsel %vm378, %v380, %v376
      %v382 = vmul.f32 1.0, %v381
      %v383 = vrcp.pop %v337
      %v384 = vmul.f32 %v337, %v383
      %v385 = vsub.f32 1.0, %v384
      %v386 = vmul.f32 %v383, %v385
      %v387 = vadd.f32 %v383, %v386
      %vm388 = vweird.f32 %v337
      %vm389 = vweird.f32 %v383
      %vm390 = vmor %vm388, %vm389
      %v391 = vsel %vm390, %v383, %v387
      %v392 = vand.u32 2147483647, %v337
      %vm393 = vcmp.eq.f32.partialorder %v392, 8.507059e+37
      %v394 = vand.u32 %v337, 2147483648
      %v395 = vor.u32 1.1754944e-38, %v394
      %v396 = vsel %vm393, %v395, %v391
      %v397 = vmul.f32 1.0, %v396
      %v402 = vrot.slane %v367, 4
      %v403 = vrot.slane %v397, 4
      %v404 = vsel %vm229, %v352, %v402
      %v405 = vsel %vm229, %v382, %v403
      %408 = vst [vmem:[%s208] sm:$0x77] %v404
      %409 = vst [vmem:[%s208 + $0x8] sm:$0x77] %v405
      %s410 = smul.u32 4, %s19
      %p411 = scmp.lt.s32.totalorder %s18, 1
      %s412 = scalar_select %p411, %s18, 1
      %p413 = scmp.lt.s32.totalorder %s410, 3
      %s414 = scalar_select %p413, %s410, 3
      %s415 = smul.addr %s412, 4
      %s416 = sadd.s32 %s414, %s415
      %s417 = smul.addr %s416, 4
      %s418 = scalar_lea.vmem %s3, %s417
      // Predicated region
      $region33: #{convolve_forward.1} parent=31 // pred_check
        %p419 = pneg %p116
      $region34: #{convolve_forward.1} parent=31 // pred_check_branch
        %421 = sbr.rel (%p419) target = $region36
      $region35: #{convolve_forward.1} parent=31 // pred_region
        %s422 = smul.u32 4, %s19
      $region36: #{convolve_forward.1} parent=31 // pred_fallthru
        _
    $region32: #{convolve_forward.1} parent=5 // pred_fallthru
      _
    %p423 = scmp.le.s32.totalorder 2, %s9
    // Predicated region
    $region37: #{convolve_forward.1} parent=5 // pred_check
      %p424 = pneg %p423
    $region38: #{convolve_forward.1} parent=5 // pred_check_branch
      %426 = sbr.rel (%p424) target = $region40
    $region39: #{convolve_forward.1} parent=5 // pred_region
      %s427 = ssub.s32 %s9, 2
      // Predicated region
      $region41: #{convolve_forward.1} parent=39 // pred_check
        %p428 = pneg %p122
      $region42: #{convolve_forward.1} parent=39 // pred_check_branch
        %430 = sbr.rel (%p428) target = $region44
      $region43: #{convolve_forward.1} parent=39 // pred_region
        %s431 = smul.u32 4, %s21
        %p432 = scmp.lt.s32.totalorder %s20, 1
        %s433 = scalar_select %p432, %s20, 1
        %p434 = scmp.lt.s32.totalorder %s431, 3
        %s435 = scalar_select %p434, %s431, 3
        %s436 = smul.addr %s433, 4
        %s437 = sadd.s32 %s435, %s436
        %s438 = smul.addr %s437, 4
        %s439 = scalar_lea.vmem %s3, %s438
      $region44: #{convolve_forward.1} parent=39 // pred_fallthru
        _
    $region40: #{convolve_forward.1} parent=5 // pred_fallthru
      _
  $region6: #{convolve_forward.1} parent=0 // loop_footer
    %s13 = sadd.s32 1, %s9
  $region7: #{convolve_forward.1} parent=0 // loop_footer_branch
    %8 = sbr.rel target = $region3
  $region8: #{convolve_forward.1} parent=0 // loop_exit
    _

</llo_original>
